<compile_context>
chip_gen: v7x
topology: tpu7x:2x2x1
jax: 0.10.0
libtpu: 0.0.40
codegen_flags: <defaults>
</compile_context>

<pallas_src>
import functools

import jax
import jax.numpy as jnp
from jax.experimental import pallas as pl
from jax.experimental.pallas import tpu as pltpu

_LANE = 128
_SUBLANE = 8

_ACTIVATIONS = {
    "relu": lambda h: jnp.maximum(h, 0.0),
    "gelu": lambda h: jax.nn.gelu(h, approximate=True),
    "silu": jax.nn.silu,
    "tanh": jnp.tanh,
    "sigmoid": jax.nn.sigmoid,
    "identity": lambda h: h,
}
_TRANSCENDENTAL_ACTS = frozenset({"gelu", "silu", "tanh", "sigmoid"})


def _round_up(x, m):
    return ((x + m - 1) // m) * m


def _vmem_limit_bytes():
    # v7x: 64 MiB physical VMEM per TensorCore -> keep scoped limit <= ~48 MiB.
    # v5e/v6e: 128 MiB physical (16/32 MiB default scoped) -> 64 MiB has headroom.
    try:
        kind = jax.devices()[0].device_kind.lower()
    except Exception:
        kind = ""
    if ("v7" in kind) or ("7x" in kind):
        return 48 * 1024 * 1024
    return 64 * 1024 * 1024


def _mlp_kernel(x_ref, w1_ref, b1_ref, w2_ref, b2_ref, o_ref, *, act_fn, matmul_dtype):
    x = x_ref[...]                                            # (TB, Dp) f32
    xm = x.astype(matmul_dtype)
    # linear_1: MXU matmul, f32 accumulate; bias add in f32 (VPU)
    h = jnp.dot(xm, w1_ref[...], preferred_element_type=jnp.float32) + b1_ref[...]
    h = act_fn(h)                                             # f32 (VPU / EUP)
    # linear_2
    y = jnp.dot(h.astype(matmul_dtype), w2_ref[...],
                preferred_element_type=jnp.float32) + b2_ref[...]
    # residual in f32
    o_ref[...] = (x + y).astype(o_ref.dtype)


def _probe_kernel(w_ref, o_ref):
    o_ref[...] = w_ref[...] + 1.0


@functools.lru_cache(maxsize=None)
def _buffered_weights_supported():
    """Probe whether pipeline_mode=pl.Buffered(1) is accepted for grid-invariant
    blocks by this JAX/Mosaic build (halves weight VMEM residency)."""
    try:
        w = jnp.zeros((_SUBLANE, _LANE), jnp.float32)
        out = pl.pallas_call(
            _probe_kernel,
            out_shape=jax.ShapeDtypeStruct((_SUBLANE, _LANE), jnp.float32),
            grid=(2,),
            in_specs=[pl.BlockSpec((_SUBLANE, _LANE), lambda i: (0, 0),
                                   pipeline_mode=pl.Buffered(1))],
            out_specs=pl.BlockSpec((_SUBLANE, _LANE), lambda i: (0, 0)),
        )(w)
        jax.block_until_ready(out)
        return True
    except Exception:
        return False


@functools.partial(
    jax.jit,
    static_argnames=("activation", "block_b", "matmul_dtype", "buffered_weights"),
)
def _mlp_forward_impl(x, w1, b1, w2, b2, *, activation, block_b, matmul_dtype,
                      buffered_weights):
    B, d_in = x.shape
    d_in_w, hidden = w1.shape
    assert d_in == d_in_w, "w1 must be (d_in, hidden)"
    assert w2.shape == (hidden, d_in), "w2 must be (hidden, d_in)"
    assert b1.shape == (hidden,) and b2.shape == (d_in,)

    act_fn = _ACTIVATIONS[activation]
    f32 = jnp.float32

    # Lane-dense feature dims (multiples of 128) -> unmasked vector stores.
    d_pad = _round_up(d_in, _LANE)
    h_pad = _round_up(hidden, _LANE)

    # Batch tile: large (MXU M-dim utilization, amortizes ~0.35us/grid-step),
    # sublane-aligned, and no larger than the (padded) batch itself.
    tile_b = _round_up(min(block_b, _round_up(B, _SUBLANE)), _SUBLANE)
    b_pad = _round_up(B, tile_b)
    grid = (b_pad // tile_b,)

    # Zero padding is mathematically inert and sliced off at the end.
    xp = jnp.pad(x.astype(f32), ((0, b_pad - B), (0, d_pad - d_in)))
    w1p = jnp.pad(w1.astype(f32), ((0, d_pad - d_in), (0, h_pad - hidden))).astype(matmul_dtype)
    w2p = jnp.pad(w2.astype(f32), ((0, h_pad - hidden), (0, d_pad - d_in))).astype(matmul_dtype)
    b1p = jnp.pad(b1.astype(f32), (0, h_pad - hidden)).reshape(1, h_pad)
    b2p = jnp.pad(b2.astype(f32), (0, d_pad - d_in)).reshape(1, d_pad)

    w_itemsize = jnp.dtype(matmul_dtype).itemsize
    cost = pl.CostEstimate(
        flops=int(4 * b_pad * d_pad * h_pad),
        transcendentals=int(b_pad * h_pad) if activation in _TRANSCENDENTAL_ACTS else 0,
        bytes_accessed=int(2 * b_pad * d_pad * 4              # x in + out (f32)
                           + 2 * d_pad * h_pad * w_itemsize   # W1 + W2
                           + (h_pad + d_pad) * 4),            # biases
    )

    # Grid-invariant weights/biases: single-buffer them if supported.
    weight_kw = {"pipeline_mode": pl.Buffered(1)} if buffered_weights else {}
    kernel = functools.partial(_mlp_kernel, act_fn=act_fn, matmul_dtype=matmul_dtype)

    out = pl.pallas_call(
        kernel,
        out_shape=jax.ShapeDtypeStruct((b_pad, d_pad), f32),
        grid_spec=pltpu.PrefetchScalarGridSpec(
            num_scalar_prefetch=0,
            grid=grid,
            in_specs=[
                pl.BlockSpec((tile_b, d_pad), lambda i: (i, 0)),               # x tile
                pl.BlockSpec((d_pad, h_pad), lambda i: (0, 0), **weight_kw),   # W1
                pl.BlockSpec((1, h_pad), lambda i: (0, 0), **weight_kw),       # b1
                pl.BlockSpec((h_pad, d_pad), lambda i: (0, 0), **weight_kw),   # W2
                pl.BlockSpec((1, d_pad), lambda i: (0, 0), **weight_kw),       # b2
            ],
            out_specs=pl.BlockSpec((tile_b, d_pad), lambda i: (i, 0)),
        ),
        compiler_params=pltpu.CompilerParams(
            dimension_semantics=("parallel",),   # batch axis shards across v7x's 2 TCs
            vmem_limit_bytes=_vmem_limit_bytes(),
        ),
        cost_estimate=cost,
    )(xp, w1p, b1p, w2p, b2p)

    return out[:B, :d_in].astype(x.dtype)


def mlp_module_forward(x, w1, b1, w2, b2, *, activation="relu", block_b=256,
                       matmul_dtype=jnp.bfloat16):
    """Forward of MLP_Module: out = x + linear_2(act(linear_1(x))).

    x: (B, d_in); w1: (d_in, hidden); b1: (hidden,); w2: (hidden, d_in); b2: (d_in,).
    """
    return _mlp_forward_impl(
        x, w1, b1, w2, b2,
        activation=activation, block_b=int(block_b), matmul_dtype=matmul_dtype,
        buffered_weights=_buffered_weights_supported(),
    )


def reference_forward(x, w1, b1, w2, b2, activation="relu"):
    act = _ACTIVATIONS[activation]
    h = act(x @ w1 + b1)
    return x + (h @ w2 + b2)


if __name__ == "__main__":
    key = jax.random.PRNGKey(0)
    kx, kw1, kb1, kw2, kb2, kx2 = jax.random.split(key, 6)

    B, D_IN, HIDDEN = 8, 32, 64
    x = jax.random.normal(kx, (B, D_IN), dtype=jnp.float32)
    w1 = jax.random.normal(kw1, (D_IN, HIDDEN), dtype=jnp.float32) * 0.1
    b1 = jax.random.normal(kb1, (HIDDEN,), dtype=jnp.float32) * 0.1
    w2 = jax.random.normal(kw2, (HIDDEN, D_IN), dtype=jnp.float32) * 0.1
    b2 = jax.random.normal(kb2, (D_IN,), dtype=jnp.float32) * 0.1

    # 1) Exact f32 path (same math as the PyTorch module).
    out_f32 = jax.block_until_ready(
        mlp_module_forward(x, w1, b1, w2, b2, activation="relu",
                           matmul_dtype=jnp.float32))
    ref = reference_forward(x, w1, b1, w2, b2, "relu")
    assert out_f32.shape == (B, D_IN)
    assert jnp.allclose(out_f32, ref, atol=1e-5, rtol=1e-5), "f32 mismatch vs reference"

    # 2) bf16-MXU fast path (f32 accumulate / bias / activation / residual).
    out_bf16 = jax.block_until_ready(
        mlp_module_forward(x, w1, b1, w2, b2, activation="relu",
                           matmul_dtype=jnp.bfloat16))
    assert jnp.allclose(out_bf16, ref, atol=2e-2, rtol=2e-2), "bf16 mismatch vs reference"

    # 3) Batch not a multiple of the tile (padded in the wrapper) + another activation.
    B2 = 20
    x2 = jax.random.normal(kx2, (B2, D_IN), dtype=jnp.float32)
    out_gelu = jax.block_until_ready(
        mlp_module_forward(x2, w1, b1, w2, b2, activation="gelu",
                           matmul_dtype=jnp.float32))
    ref_gelu = reference_forward(x2, w1, b1, w2, b2, "gelu")
    assert out_gelu.shape == (B2, D_IN)
    assert jnp.allclose(out_gelu, ref_gelu, atol=1e-3, rtol=1e-3), "gelu mismatch vs reference"

    print("KERNEL_OK")
</pallas_src>

<mosaic_0001>
module attributes {stable_mosaic.version = 11 : i64} {
  func.func @_probe_kernel(%arg0: i32, %arg1: memref<8x128xf32, #tpu.memory_space<vmem>>, %arg2: memref<8x128xf32, #tpu.memory_space<vmem>>) attributes {dimension_semantics = [#tpu.dimension_semantics<arbitrary>], iteration_bounds = array<i64: 2>, scalar_prefetch = 0 : i64, scratch_operands = 0 : i64, tpu.core_type = #tpu.core_type<tc>, window_params = [{pipeline_mode = #tpu.pipeline_mode<synchronous>, transform_indices = @transform_0, window_bounds = array<i64: 8, 128>}, {pipeline_mode = #tpu.pipeline_mode<synchronous>, transform_indices = @transform_1, window_bounds = array<i64: 8, 128>}]} {
    %c0 = arith.constant 0 : index
    %c0_0 = arith.constant 0 : index
    %0 = vector.load %arg1[%c0, %c0_0] : memref<8x128xf32, #tpu.memory_space<vmem>>, vector<8x128xf32>
    %cst = arith.constant 1.000000e+00 : f32
    %1 = vector.broadcast %cst : f32 to vector<8x128xf32>
    %2 = arith.addf %0, %1 : vector<8x128xf32>
    %c0_1 = arith.constant 0 : index
    %c0_2 = arith.constant 0 : index
    %3 = vector.load %arg2[%c0_1, %c0_2] : memref<8x128xf32, #tpu.memory_space<vmem>>, vector<8x128xf32>
    tpu.vector_store %arg2[%c0_1, %c0_2], %2 {strides = array<i32>} : memref<8x128xf32, #tpu.memory_space<vmem>>, vector<8x128xf32>,
    return
  }
  func.func @transform_0(%arg0: i32) -> (i32, i32) {
    %c0_i32 = arith.constant 0 : i32
    %c0_i32_0 = arith.constant 0 : i32
    %c0_i32_1 = arith.constant 0 : i32
    return %c0_i32, %c0_i32_0 : i32, i32
  }
  func.func @transform_1(%arg0: i32) -> (i32, i32) {
    %c0_i32 = arith.constant 0 : i32
    %c0_i32_0 = arith.constant 0 : i32
    %c0_i32_1 = arith.constant 0 : i32
    return %c0_i32, %c0_i32_0 : i32, i32
  }
}

module attributes {stable_mosaic.version = 11 : i64} {
  func.func @_mlp_kernel(%arg0: i32, %arg1: memref<8x128xf32, #tpu.memory_space<vmem>>, %arg2: memref<128x128xf32, #tpu.memory_space<vmem>>, %arg3: memref<1x128xf32, #tpu.memory_space<vmem>>, %arg4: memref<128x128xf32, #tpu.memory_space<vmem>>, %arg5: memref<1x128xf32, #tpu.memory_space<vmem>>, %arg6: memref<8x128xf32, #tpu.memory_space<vmem>>) attributes {dimension_semantics = [#tpu.dimension_semantics<parallel>], iteration_bounds = array<i64: 1>, scalar_prefetch = 0 : i64, scratch_operands = 0 : i64, tpu.core_type = #tpu.core_type<tc>, window_params = [{transform_indices = @transform_0, window_bounds = array<i64: 8, 128>}, {pipeline_mode = #tpu.pipeline_mode<synchronous>, transform_indices = @transform_1, window_bounds = array<i64: 128, 128>}, {pipeline_mode = #tpu.pipeline_mode<synchronous>, transform_indices = @transform_2, window_bounds = array<i64: 1, 128>}, {pipeline_mode = #tpu.pipeline_mode<synchronous>, transform_indices = @transform_3, window_bounds = array<i64: 128, 128>}, {pipeline_mode = #tpu.pipeline_mode<synchronous>, transform_indices = @transform_4, window_bounds = array<i64: 1, 128>}, {transform_indices = @transform_5, window_bounds = array<i64: 8, 128>}]} {
    %c0 = arith.constant 0 : index
    %c0_0 = arith.constant 0 : index
    %0 = vector.load %arg1[%c0, %c0_0] : memref<8x128xf32, #tpu.memory_space<vmem>>, vector<8x128xf32>
    %c0_1 = arith.constant 0 : index
    %c0_2 = arith.constant 0 : index
    %1 = vector.load %arg2[%c0_1, %c0_2] : memref<128x128xf32, #tpu.memory_space<vmem>>, vector<128x128xf32>
    %cst = arith.constant dense<0.000000e+00> : vector<8x128xf32>
    %2 = tpu.matmul %0, %1, %cst {dimension_numbers = #tpu.dot_dimension_numbers<[1], [0], [0], [1], [0, 0, 1, 1], [], []>} : vector<8x128xf32>, vector<128x128xf32>, vector<8x128xf32> -> vector<8x128xf32>
    %c0_3 = arith.constant 0 : index
    %c0_4 = arith.constant 0 : index
    %3 = vector.load %arg3[%c0_3, %c0_4] : memref<1x128xf32, #tpu.memory_space<vmem>>, vector<1x128xf32>
    %4 = vector.broadcast %3 : vector<1x128xf32> to vector<8x128xf32>
    %5 = arith.addf %2, %4 : vector<8x128xf32>
    %cst_5 = arith.constant 0.000000e+00 : f32
    %6 = vector.broadcast %cst_5 : f32 to vector<8x128xf32>
    %7 = arith.maximumf %5, %6 : vector<8x128xf32>
    %c0_6 = arith.constant 0 : index
    %c0_7 = arith.constant 0 : index
    %8 = vector.load %arg4[%c0_6, %c0_7] : memref<128x128xf32, #tpu.memory_space<vmem>>, vector<128x128xf32>
    %cst_8 = arith.constant dense<0.000000e+00> : vector<8x128xf32>
    %9 = tpu.matmul %7, %8, %cst_8 {dimension_numbers = #tpu.dot_dimension_numbers<[1], [0], [0], [1], [0, 0, 1, 1], [], []>} : vector<8x128xf32>, vector<128x128xf32>, vector<8x128xf32> -> vector<8x128xf32>
    %c0_9 = arith.constant 0 : index
    %c0_10 = arith.constant 0 : index
    %10 = vector.load %arg5[%c0_9, %c0_10] : memref<1x128xf32, #tpu.memory_space<vmem>>, vector<1x128xf32>
    %11 = vector.broadcast %10 : vector<1x128xf32> to vector<8x128xf32>
    %12 = arith.addf %9, %11 : vector<8x128xf32>
    %13 = arith.addf %0, %12 : vector<8x128xf32>
    %c0_11 = arith.constant 0 : index
    %c0_12 = arith.constant 0 : index
    %14 = vector.load %arg6[%c0_11, %c0_12] : memref<8x128xf32, #tpu.memory_space<vmem>>, vector<8x128xf32>
    tpu.vector_store %arg6[%c0_11, %c0_12], %13 {strides = array<i32>} : memref<8x128xf32, #tpu.memory_space<vmem>>, vector<8x128xf32>,
    return
  }
  func.func @transform_0(%arg0: i32) -> (i32, i32) {
    %c0_i32 = arith.constant 0 : i32
    %c0_i32_0 = arith.constant 0 : i32
    return %arg0, %c0_i32 : i32, i32
  }
  func.func @transform_1(%arg0: i32) -> (i32, i32) {
    %c0_i32 = arith.constant 0 : i32
    %c0_i32_0 = arith.constant 0 : i32
    %c0_i32_1 = arith.constant 0 : i32
    return %c0_i32, %c0_i32_0 : i32, i32
  }
  func.func @transform_2(%arg0: i32) -> (i32, i32) {
    %c0_i32 = arith.constant 0 : i32
    %c0_i32_0 = arith.constant 0 : i32
    %c0_i32_1 = arith.constant 0 : i32
    return %c0_i32, %c0_i32_0 : i32, i32
  }
  func.func @transform_3(%arg0: i32) -> (i32, i32) {
    %c0_i32 = arith.constant 0 : i32
    %c0_i32_0 = arith.constant 0 : i32
    %c0_i32_1 = arith.constant 0 : i32
    return %c0_i32, %c0_i32_0 : i32, i32
  }
  func.func @transform_4(%arg0: i32) -> (i32, i32) {
    %c0_i32 = arith.constant 0 : i32
    %c0_i32_0 = arith.constant 0 : i32
    %c0_i32_1 = arith.constant 0 : i32
    return %c0_i32, %c0_i32_0 : i32, i32
  }
  func.func @transform_5(%arg0: i32) -> (i32, i32) {
    %c0_i32 = arith.constant 0 : i32
    %c0_i32_0 = arith.constant 0 : i32
    return %arg0, %c0_i32 : i32, i32
  }
}

</mosaic_0001>

<llo_original>
// kernel: tpu_custom_call.1
$region0: #{tpu_custom_call.1}
  #allocation0 [shape = 'u32[]', space=smem, size = 0x4, offset = 0x4, fixed_abs, tag = 'smem constant byte address 0x4 - core index']
  #allocation1 [shape = 'u32[144,128]{1,0:T(1,128)}', space=vmem, size = 0x12000, scoped, tag = 'internal scratch']
  %s0 = inlined_call_operand.hbm [shape: f32[8,128], index: 0, kind: input, shape index: {}]
  %s1 = inlined_call_operand.hbm [shape: f32[8,128], index: 1, kind: output, shape index: {}]
  %s2 = sld [smem:[#allocation0]]
  $region41: #{tpu_custom_call.1} parent=0
    _
  %s4 = ssub.s32 1, %s2
  %s5 = scalar_select 0, %s4, %s2
  $region1: #{tpu_custom_call.1} parent=0
    #allocation2 [shape = 'u8[4096]{0}', space=vmem, size = 0x1000, scoped, tag = 'input window, operand 0, single buffered']
    #allocation3 [shape = 's32[2]{0}', space=sflag, size = 0x8, scoped, tag = 'scoped memory for tpu_custom_call.1']
    #allocation4 [shape = 's32[2]{0}', space=sflag, size = 0x8, scoped, tag = 'scoped memory for tpu_custom_call.1']
    #allocation5 [shape = 'u8[4096]{0}', space=vmem, size = 0x1000, scoped, tag = 'output window, operand 0, single buffered']
    %6 = vsyncpa [#allocation3], 0
    %7 = vsyncpa [#allocation4], 0
    loop: start=0, step=1, limit=4
    $region2: #{tpu_custom_call.1} parent=1 // loop_pre_header
      _
    $region3: #{tpu_custom_call.1} parent=1 // loop_header
      %s9 = sphi 0, %s13
      %p10 = scmp.ge.s32.totalorder %s9, 4
      %s17 = sphi 0, %s17
      %s19 = sphi 0, %s17
      %s20 = sphi 0, %s19
      %s34 = sphi 0, %s20
      %s38 = sphi 0, %s38
      %s40 = sphi 0, %s38
      %s41 = sphi 0, %s40
      %s55 = sphi 0, %s41
    $region4: #{tpu_custom_call.1} parent=1 // loop_header_branch
      %12 = sbr.rel (%p10) target = $region8
    $region5: #{tpu_custom_call.1} parent=1 // loop_body
      %s14 = ssub.s32 %s9, 1
      %s15 = ssub.s32 %s9, 2
      %s16 = sadd.s32 %s9, 1
      %s18 = sadd.s32 %s17, 1
      %p21 = scmp.eq.s32.totalorder %s9, 1
      %p22 = scmp.ne.s32.totalorder %s17, %s19
      %p23 = scmp.eq.s32.totalorder %s9, 0
      %p24 = por %p22, %p23
      %p25 = scmp.ne.s32.totalorder %s17, %s19
      %p26 = scmp.eq.s32.totalorder %s14, 1
      %p27 = por %p25, %p26
      %p28 = scmp.ne.s32.totalorder %s19, %s20
      %p29 = scmp.eq.s32.totalorder %s14, 0
      %p30 = por %p28, %p29
      %p31 = scmp.ne.s32.totalorder %s19, %s20
      %p32 = scmp.eq.s32.totalorder %s15, 1
      %p33 = por %p31, %p32
      %p35 = scmp.ne.s32.totalorder %s20, %s34
      %p36 = scmp.eq.s32.totalorder %s15, 0
      %p37 = por %p35, %p36
      %s39 = sadd.s32 %s38, 1
      %p42 = scmp.eq.s32.totalorder %s9, 1
      %p43 = scmp.ne.s32.totalorder %s38, %s40
      %p44 = scmp.eq.s32.totalorder %s9, 0
      %p45 = por %p43, %p44
      %p46 = scmp.ne.s32.totalorder %s38, %s40
      %p47 = scmp.eq.s32.totalorder %s14, 1
      %p48 = por %p46, %p47
      %p49 = scmp.ne.s32.totalorder %s40, %s41
      %p50 = scmp.eq.s32.totalorder %s14, 0
      %p51 = por %p49, %p50
      %p52 = scmp.ne.s32.totalorder %s40, %s41
      %p53 = scmp.eq.s32.totalorder %s15, 1
      %p54 = por %p52, %p53
      %p56 = scmp.ne.s32.totalorder %s41, %s55
      %p57 = scmp.eq.s32.totalorder %s15, 0
      %p58 = por %p56, %p57
      %p59 = scmp.le.s32.totalorder 1, %s9
      %p60 = scmp.lt.s32.totalorder %s9, 3
      %p61 = pnand %p59, %p60
      %p62 = pneg %p61
      // Predicated region
      $region9: #{tpu_custom_call.1} parent=5 // pred_check
        _
      $region10: #{tpu_custom_call.1} parent=5 // pred_check_branch
        %64 = sbr.rel (%p61) target = $region12
      $region11: #{tpu_custom_call.1} parent=5 // pred_region
        %s65 = ssub.s32 %s9, 1
        // Predicated region
        $region13: #{tpu_custom_call.1} parent=11 // pred_check
          %p66 = pneg %p30
        $region14: #{tpu_custom_call.1} parent=11 // pred_check_branch
          %68 = sbr.rel (%p66) target = $region16
        $region15: #{tpu_custom_call.1} parent=11 // pred_region
          %s70 = ssub.s32 128, 128
          %71 = vsyncadd [#allocation3], %s70
          %s73 = sshll.u32 [#allocation2], 4
          %s74 = int_to_ptr.vmem [resolvable:$true] %s73
          %76 = dma.hbm_to_vmem [thread:$0]  %s0, 128, %s74, [#allocation3]
        $region16: #{tpu_custom_call.1} parent=11 // pred_fallthru
          _
      $region12: #{tpu_custom_call.1} parent=5 // pred_fallthru
        _
      %p77 = scmp.lt.s32.totalorder %s9, 2
      // Predicated region
      $region17: #{tpu_custom_call.1} parent=5 // pred_check
        %p78 = pneg %p77
      $region18: #{tpu_custom_call.1} parent=5 // pred_check_branch
        %80 = sbr.rel (%p78) target = $region20
      $region19: #{tpu_custom_call.1} parent=5 // pred_region
        _
      $region20: #{tpu_custom_call.1} parent=5 // pred_fallthru
        _
      %p81 = scmp.le.s32.totalorder 1, %s9
      %p82 = scmp.lt.s32.totalorder %s9, 3
      %p83 = pnand %p81, %p82
      %p84 = pneg %p83
      // Predicated region
      $region21: #{tpu_custom_call.1} parent=5 // pred_check
        _
      $region22: #{tpu_custom_call.1} parent=5 // pred_check_branch
        %86 = sbr.rel (%p83) target = $region24
      $region23: #{tpu_custom_call.1} parent=5 // pred_region
        %s87 = ssub.s32 %s9, 1
        // Predicated region
        $region25: #{tpu_custom_call.1} parent=23 // pred_check
          %p88 = pneg %p30
        $region26: #{tpu_custom_call.1} parent=23 // pred_check_branch
          %90 = sbr.rel (%p88) target = $region28
        $region27: #{tpu_custom_call.1} parent=23 // pred_region
          %91 = dma.done [#allocation3], 128
        $region28: #{tpu_custom_call.1} parent=23 // pred_fallthru
          _
        %p92 = pneg %p30
        %p93 = pneg %p27
        %p94 = pneg %p51
        %p95 = pneg %p48
        %v96 = vld [vmem:[#allocation2] sm:$0xff]
        %v97 = vadd.f32 %v96, 1.0
        %98 = vst [vmem:[#allocation5] sm:$0xff] %v97
        // Predicated region
        $region29: #{tpu_custom_call.1} parent=23 // pred_check
          %p99 = pneg %p48
        $region30: #{tpu_custom_call.1} parent=23 // pred_check_branch
          %101 = sbr.rel (%p99) target = $region32
        $region31: #{tpu_custom_call.1} parent=23 // pred_region
          %s103 = ssub.s32 128, 128
          %104 = vsyncadd [#allocation4], %s103
          %s106 = sshll.u32 [#allocation5], 4
          %s107 = int_to_ptr.vmem [resolvable:$true] %s106
          %109 = dma.vmem_to_hbm [thread:$0]  %s107, 128, %s1, [#allocation4]
        $region32: #{tpu_custom_call.1} parent=23 // pred_fallthru
          _
        // Predicated region
        $region33: #{tpu_custom_call.1} parent=23 // pred_check
          %p110 = pneg %p48
        $region34: #{tpu_custom_call.1} parent=23 // pred_check_branch
          %112 = sbr.rel (%p110) target = $region36
        $region35: #{tpu_custom_call.1} parent=23 // pred_region
          %113 = dma.done [#allocation4], 128
        $region36: #{tpu_custom_call.1} parent=23 // pred_fallthru
          _
      $region24: #{tpu_custom_call.1} parent=5 // pred_fallthru
        _
      %p114 = scmp.le.s32.totalorder 2, %s9
      // Predicated region
      $region37: #{tpu_custom_call.1} parent=5 // pred_check
        %p115 = pneg %p114
      $region38: #{tpu_custom_call.1} parent=5 // pred_check_branch
        %117 = sbr.rel (%p115) target = $region40
      $region39: #{tpu_custom_call.1} parent=5 // pred_region
        %s118 = ssub.s32 %s9, 2
      $region40: #{tpu_custom_call.1} parent=5 // pred_fallthru
        _
    $region6: #{tpu_custom_call.1} parent=1 // loop_footer
      %s13 = sadd.s32 1, %s9
    $region7: #{tpu_custom_call.1} parent=1 // loop_footer_branch
      %8 = sbr.rel target = $region3
    $region8: #{tpu_custom_call.1} parent=1 // loop_exit
      _
    %119 = vsyncpa [#allocation3], 1
    %s120 = scalar_lea.sflag [#allocation3], 1
    %121 = vsyncpa %s120, 1
    %122 = vsyncpa [#allocation4], 1
    %s123 = scalar_lea.sflag [#allocation4], 1
    %124 = vsyncpa %s123, 1

// kernel: _mlp_forward_impl.1
$region0: #{_mlp_forward_impl.1}
  #allocation0 [shape = 'u32[]', space=smem, size = 0x4, offset = 0x4, fixed_abs, tag = 'smem constant byte address 0x4 - core index']
  #allocation1 [shape = 'u32[144,128]{1,0:T(1,128)}', space=vmem, size = 0x12000, scoped, tag = 'internal scratch']
  %s0 = inlined_call_operand.hbm [shape: f32[8,128], index: 0, kind: input, shape index: {}]
  %s1 = inlined_call_operand.hbm [shape: f32[128,128], index: 1, kind: input, shape index: {}]
  %s2 = inlined_call_operand.hbm [shape: f32[1,128], index: 2, kind: input, shape index: {}]
  %s3 = inlined_call_operand.hbm [shape: f32[128,128], index: 3, kind: input, shape index: {}]
  %s4 = inlined_call_operand.hbm [shape: f32[1,128], index: 4, kind: input, shape index: {}]
  %s5 = inlined_call_operand.hbm [shape: f32[8,128], index: 5, kind: output, shape index: {}]
  %s6 = sld [smem:[#allocation0]]
  $region50: #{_mlp_forward_impl.1} parent=0
    _
  %s8 = ssub.s32 1, %s6
  %s9 = scalar_select 0, %s8, %s6
  $region1: #{_mlp_forward_impl.1} parent=0
    #allocation2 [shape = 'u8[4096]{0}', space=vmem, size = 0x1000, scoped, tag = 'input window, operand 0, single buffered']
    #allocation3 [shape = 's32[1]{0}', space=sflag, size = 0x4, scoped, tag = 'scoped memory for _mlp_forward_impl.1']
    #allocation4 [shape = 's32[1]{0}', space=sflag, size = 0x4, scoped, tag = 'scoped memory for _mlp_forward_impl.1']
    #allocation5 [shape = 'u8[65536]{0}', space=vmem, size = 0x10000, scoped, tag = 'input window, operand 1, single buffered']
    #allocation6 [shape = 's32[1]{0}', space=sflag, size = 0x4, scoped, tag = 'scoped memory for _mlp_forward_impl.1']
    #allocation7 [shape = 'u8[512]{0}', space=vmem, size = 0x400, scoped, tag = 'input window, operand 2, single buffered']
    #allocation8 [shape = 'u8[65536]{0}', space=vmem, size = 0x10000, scoped, tag = 'input window, operand 3, single buffered']
    #allocation9 [shape = 's32[1]{0}', space=sflag, size = 0x4, scoped, tag = 'scoped memory for _mlp_forward_impl.1']
    #allocation10 [shape = 'u8[512]{0}', space=vmem, size = 0x400, scoped, tag = 'input window, operand 4, single buffered']
    #allocation11 [shape = 'u8[4096]{0}', space=vmem, size = 0x1000, scoped, tag = 'output window, operand 0, single buffered']
    %10 = vsyncpa [#allocation3], 0
    %11 = vsyncpa [#allocation6], 0
    %12 = vsyncpa [#allocation9], 0
    %13 = vsyncpa [#allocation4], 0
    // Predicated region
    $region2: #{_mlp_forward_impl.1} parent=1 // pred_check
      _
    $region3: #{_mlp_forward_impl.1} parent=1 // pred_check_branch
      %15 = sbr.rel (0) target = $region5
    $region4: #{_mlp_forward_impl.1} parent=1 // pred_region
      %s17 = ssub.s32 128, 128
      %18 = vsyncadd [#allocation3], %s17
      %s20 = sshll.u32 [#allocation2], 4
      %s21 = int_to_ptr.vmem [resolvable:$true] %s20
      %23 = dma.hbm_to_vmem [thread:$0]  %s0, 128, %s21, [#allocation3]
    $region5: #{_mlp_forward_impl.1} parent=1 // pred_fallthru
      _
    // Predicated region
    $region6: #{_mlp_forward_impl.1} parent=1 // pred_check
      _
    $region7: #{_mlp_forward_impl.1} parent=1 // pred_check_branch
      %25 = sbr.rel (0) target = $region9
    $region8: #{_mlp_forward_impl.1} parent=1 // pred_region
      %s27 = ssub.s32 2048, 2048
      %28 = vsyncadd [#allocation6], %s27
      %s29 = sshll.u32 [#allocation5], 4
      %s30 = int_to_ptr.vmem [resolvable:$true] %s29
      %35 = dma.hbm_to_vmem [thread:$0]  %s1, 2048, %s30, [#allocation6], 128, 128, 8
    $region9: #{_mlp_forward_impl.1} parent=1 // pred_fallthru
      _
    // Predicated region
    $region10: #{_mlp_forward_impl.1} parent=1 // pred_check
      _
    $region11: #{_mlp_forward_impl.1} parent=1 // pred_check_branch
      %37 = sbr.rel (0) target = $region13
    $region12: #{_mlp_forward_impl.1} parent=1 // pred_region
      %s39 = ssub.s32 16, 16
      %40 = vsyncadd [#allocation6], %s39
      %s42 = sshll.u32 [#allocation7], 4
      %s43 = int_to_ptr.vmem [resolvable:$true] %s42
      %45 = dma.hbm_to_vmem [thread:$0]  %s2, 16, %s43, [#allocation6]
    $region13: #{_mlp_forward_impl.1} parent=1 // pred_fallthru
      _
    // Predicated region
    $region14: #{_mlp_forward_impl.1} parent=1 // pred_check
      _
    $region15: #{_mlp_forward_impl.1} parent=1 // pred_check_branch
      %47 = sbr.rel (0) target = $region17
    $region16: #{_mlp_forward_impl.1} parent=1 // pred_region
      %s49 = ssub.s32 2048, 2048
      %50 = vsyncadd [#allocation9], %s49
      %s51 = sshll.u32 [#allocation8], 4
      %s52 = int_to_ptr.vmem [resolvable:$true] %s51
      %57 = dma.hbm_to_vmem [thread:$0]  %s3, 2048, %s52, [#allocation9], 128, 128, 8
    $region17: #{_mlp_forward_impl.1} parent=1 // pred_fallthru
      _
    // Predicated region
    $region18: #{_mlp_forward_impl.1} parent=1 // pred_check
      _
    $region19: #{_mlp_forward_impl.1} parent=1 // pred_check_branch
      %59 = sbr.rel (0) target = $region21
    $region20: #{_mlp_forward_impl.1} parent=1 // pred_region
      %s61 = ssub.s32 16, 16
      %62 = vsyncadd [#allocation9], %s61
      %s64 = sshll.u32 [#allocation10], 4
      %s65 = int_to_ptr.vmem [resolvable:$true] %s64
      %67 = dma.hbm_to_vmem [thread:$0]  %s4, 16, %s65, [#allocation9]
    $region21: #{_mlp_forward_impl.1} parent=1 // pred_fallthru
      _
    // Predicated region
    $region22: #{_mlp_forward_impl.1} parent=1 // pred_check
      _
    $region23: #{_mlp_forward_impl.1} parent=1 // pred_check_branch
      %69 = sbr.rel (0) target = $region25
    $region24: #{_mlp_forward_impl.1} parent=1 // pred_region
      %70 = dma.done [#allocation3], 128
    $region25: #{_mlp_forward_impl.1} parent=1 // pred_fallthru
      _
    // Predicated region
    $region26: #{_mlp_forward_impl.1} parent=1 // pred_check
      _
    $region27: #{_mlp_forward_impl.1} parent=1 // pred_check_branch
      %72 = sbr.rel (0) target = $region29
    $region28: #{_mlp_forward_impl.1} parent=1 // pred_region
      %73 = dma.done [#allocation6], 2048
    $region29: #{_mlp_forward_impl.1} parent=1 // pred_fallthru
      _
    // Predicated region
    $region30: #{_mlp_forward_impl.1} parent=1 // pred_check
      _
    $region31: #{_mlp_forward_impl.1} parent=1 // pred_check_branch
      %75 = sbr.rel (0) target = $region33
    $region32: #{_mlp_forward_impl.1} parent=1 // pred_region
      %76 = dma.done [#allocation6], 16
    $region33: #{_mlp_forward_impl.1} parent=1 // pred_fallthru
      _
    // Predicated region
    $region34: #{_mlp_forward_impl.1} parent=1 // pred_check
      _
    $region35: #{_mlp_forward_impl.1} parent=1 // pred_check_branch
      %78 = sbr.rel (0) target = $region37
    $region36: #{_mlp_forward_impl.1} parent=1 // pred_region
      %79 = dma.done [#allocation9], 2048
    $region37: #{_mlp_forward_impl.1} parent=1 // pred_fallthru
      _
    // Predicated region
    $region38: #{_mlp_forward_impl.1} parent=1 // pred_check
      _
    $region39: #{_mlp_forward_impl.1} parent=1 // pred_check_branch
      %81 = sbr.rel (0) target = $region41
    $region40: #{_mlp_forward_impl.1} parent=1 // pred_region
      %82 = dma.done [#allocation9], 16
    $region41: #{_mlp_forward_impl.1} parent=1 // pred_fallthru
      _
    %v83 = vld [vmem:[#allocation2] sm:$0xff]
    %v84 = vld [vmem:[#allocation5] sm:$0xff]
    %v85 = vld [vmem:[#allocation5 + $0x8] sm:$0xff]
    %v86 = vld [vmem:[#allocation5 + $0x10] sm:$0xff]
    %v87 = vld [vmem:[#allocation5 + $0x18] sm:$0xff]
    %v88 = vld [vmem:[#allocation5 + $0x20] sm:$0xff]
    %v89 = vld [vmem:[#allocation5 + $0x28] sm:$0xff]
    %v90 = vld [vmem:[#allocation5 + $0x30] sm:$0xff]
    %v91 = vld [vmem:[#allocation5 + $0x38] sm:$0xff]
    %v92 = vld [vmem:[#allocation5 + $0x40] sm:$0xff]
    %v93 = vld [vmem:[#allocation5 + $0x48] sm:$0xff]
    %v94 = vld [vmem:[#allocation5 + $0x50] sm:$0xff]
    %v95 = vld [vmem:[#allocation5 + $0x58] sm:$0xff]
    %v96 = vld [vmem:[#allocation5 + $0x60] sm:$0xff]
    %v97 = vld [vmem:[#allocation5 + $0x68] sm:$0xff]
    %v98 = vld [vmem:[#allocation5 + $0x70] sm:$0xff]
    %v99 = vld [vmem:[#allocation5 + $0x78] sm:$0xff]
    %v100 = vld [vmem:[#allocation7] sm:$0x1]
    %v102 = vlaneseq
    %v103 = vshrl.u32 %v102, 7
    %v104 = vsub.s32 0, %v103
    %v105 = vrot.slane %v100, %v104
    %107 = vmatprep.subr.mxu0 0.0
    %108 = vmatpush1.msra.mxu0 %v84
    %109 = vmatprep.subr.mxu0 0.0
    %110 = vmatpush1.msra.mxu0 %v85
    %111 = vmatprep.subr.mxu0 0.0
    %112 = vmatpush1.msra.mxu0 %v86
    %113 = vmatprep.subr.mxu0 0.0
    %114 = vmatpush1.msra.mxu0 %v87
    %115 = vmatprep.subr.mxu0 0.0
    %116 = vmatpush1.msra.mxu0 %v88
    %117 = vmatprep.subr.mxu0 0.0
    %118 = vmatpush1.msra.mxu0 %v89
    %119 = vmatprep.subr.mxu0 0.0
    %120 = vmatpush1.msra.mxu0 %v90
    %121 = vmatprep.subr.mxu0 0.0
    %122 = vmatpush1.msra.mxu0 %v91
    %123 = vmatprep.subr.mxu0 0.0
    %124 = vmatpush1.msra.mxu0 %v92
    %125 = vmatprep.subr.mxu0 0.0
    %126 = vmatpush1.msra.mxu0 %v93
    %127 = vmatprep.subr.mxu0 0.0
    %128 = vmatpush1.msra.mxu0 %v94
    %129 = vmatprep.subr.mxu0 0.0
    %130 = vmatpush1.msra.mxu0 %v95
    %131 = vmatprep.subr.mxu0 0.0
    %132 = vmatpush1.msra.mxu0 %v96
    %133 = vmatprep.subr.mxu0 0.0
    %134 = vmatpush1.msra.mxu0 %v97
    %135 = vmatprep.subr.mxu0 0.0
    %136 = vmatpush1.msra.mxu0 %v98
    %137 = vmatprep.subr.mxu0 0.0
    %138 = vmatpush1.msra.mxu0 %v99
    %139 = vmatprep.subr.mxu0 0.0
    %140 = vmatpush1.msra.mxu0 0.0
    %141 = vmatprep.subr.mxu0 0.0
    %142 = vmatpush1.msra.mxu0 0.0
    %143 = vmatprep.subr.mxu0 0.0
    %144 = vmatpush1.msra.mxu0 0.0
    %145 = vmatprep.subr.mxu0 0.0
    %146 = vmatpush1.msra.mxu0 0.0
    %147 = vmatprep.subr.mxu0 0.0
    %148 = vmatpush1.msra.mxu0 0.0
    %149 = vmatprep.subr.mxu0 0.0
    %150 = vmatpush1.msra.mxu0 0.0
    %151 = vmatprep.subr.mxu0 0.0
    %152 = vmatpush1.msra.mxu0 0.0
    %153 = vmatprep.subr.mxu0 0.0
    %154 = vmatpush1.msra.mxu0 0.0
    %155 = vmatprep.subr.mxu0 0.0
    %156 = vmatpush1.msra.mxu0 0.0
    %157 = vmatprep.subr.mxu0 0.0
    %158 = vmatpush1.msra.mxu0 0.0
    %159 = vmatprep.subr.mxu0 0.0
    %160 = vmatpush1.msra.mxu0 0.0
    %161 = vmatprep.subr.mxu0 0.0
    %162 = vmatpush1.msra.mxu0 0.0
    %163 = vmatprep.subr.mxu0 0.0
    %164 = vmatpush1.msra.mxu0 0.0
    %165 = vmatprep.subr.mxu0 0.0
    %166 = vmatpush1.msra.mxu0 0.0
    %167 = vmatprep.subr.mxu0 0.0
    %168 = vmatpush1.msra.mxu0 0.0
    %169 = vmatprep.subr.mxu0 0.0
    %170 = vmatpush1.msra.mxu0 0.0
    %171 = vmatprep.mubr.f32.mxu0 0.0
    %172 = vmatmul.mubr.f32.gmra.mrb[0].mxu0 %v83
    %v173 = vpop.f32.mrb[0].mxu0
    %v174 = vadd.f32 %v105, %v173
    %v175 = vpop.f32.mrb[0].mxu0
    %176 = vdwg.mxu0
    %v177 = vmax.f32 %v174, 0.0
    %v178 = vld [vmem:[#allocation8] sm:$0xff]
    %v179 = vld [vmem:[#allocation8 + $0x8] sm:$0xff]
    %v180 = vld [vmem:[#allocation8 + $0x10] sm:$0xff]
    %v181 = vld [vmem:[#allocation8 + $0x18] sm:$0xff]
    %v182 = vld [vmem:[#allocation8 + $0x20] sm:$0xff]
    %v183 = vld [vmem:[#allocation8 + $0x28] sm:$0xff]
    %v184 = vld [vmem:[#allocation8 + $0x30] sm:$0xff]
    %v185 = vld [vmem:[#allocation8 + $0x38] sm:$0xff]
    %v186 = vld [vmem:[#allocation8 + $0x40] sm:$0xff]
    %v187 = vld [vmem:[#allocation8 + $0x48] sm:$0xff]
    %v188 = vld [vmem:[#allocation8 + $0x50] sm:$0xff]
    %v189 = vld [vmem:[#allocation8 + $0x58] sm:$0xff]
    %v190 = vld [vmem:[#allocation8 + $0x60] sm:$0xff]
    %v191 = vld [vmem:[#allocation8 + $0x68] sm:$0xff]
    %v192 = vld [vmem:[#allocation8 + $0x70] sm:$0xff]
    %v193 = vld [vmem:[#allocation8 + $0x78] sm:$0xff]
    %v194 = vld [vmem:[#allocation10] sm:$0x1]
    %v196 = vlaneseq
    %v197 = vshrl.u32 %v196, 7
    %v198 = vsub.s32 0, %v197
    %v199 = vrot.slane %v194, %v198
    %201 = vmatprep.subr.mxu0 0.0
    %202 = vmatpush1.msra.mxu0 %v178
    %203 = vmatprep.subr.mxu0 0.0
    %204 = vmatpush1.msra.mxu0 %v179
    %205 = vmatprep.subr.mxu0 0.0
    %206 = vmatpush1.msra.mxu0 %v180
    %207 = vmatprep.subr.mxu0 0.0
    %208 = vmatpush1.msra.mxu0 %v181
    %209 = vmatprep.subr.mxu0 0.0
    %210 = vmatpush1.msra.mxu0 %v182
    %211 = vmatprep.subr.mxu0 0.0
    %212 = vmatpush1.msra.mxu0 %v183
    %213 = vmatprep.subr.mxu0 0.0
    %214 = vmatpush1.msra.mxu0 %v184
    %215 = vmatprep.subr.mxu0 0.0
    %216 = vmatpush1.msra.mxu0 %v185
    %217 = vmatprep.subr.mxu0 0.0
    %218 = vmatpush1.msra.mxu0 %v186
    %219 = vmatprep.subr.mxu0 0.0
    %220 = vmatpush1.msra.mxu0 %v187
    %221 = vmatprep.subr.mxu0 0.0
    %222 = vmatpush1.msra.mxu0 %v188
    %223 = vmatprep.subr.mxu0 0.0
    %224 = vmatpush1.msra.mxu0 %v189
    %225 = vmatprep.subr.mxu0 0.0
    %226 = vmatpush1.msra.mxu0 %v190
    %227 = vmatprep.subr.mxu0 0.0
    %228 = vmatpush1.msra.mxu0 %v191
    %229 = vmatprep.subr.mxu0 0.0
    %230 = vmatpush1.msra.mxu0 %v192
    %231 = vmatprep.subr.mxu0 0.0
    %232 = vmatpush1.msra.mxu0 %v193
    %233 = vmatprep.subr.mxu0 0.0
    %234 = vmatpush1.msra.mxu0 0.0
    %235 = vmatprep.subr.mxu0 0.0
    %236 = vmatpush1.msra.mxu0 0.0
    %237 = vmatprep.subr.mxu0 0.0
    %238 = vmatpush1.msra.mxu0 0.0
    %239 = vmatprep.subr.mxu0 0.0
    %240 = vmatpush1.msra.mxu0 0.0
    %241 = vmatprep.subr.mxu0 0.0
    %242 = vmatpush1.msra.mxu0 0.0
    %243 = vmatprep.subr.mxu0 0.0
    %244 = vmatpush1.msra.mxu0 0.0
    %245 = vmatprep.subr.mxu0 0.0
    %246 = vmatpush1.msra.mxu0 0.0
    %247 = vmatprep.subr.mxu0 0.0
    %248 = vmatpush1.msra.mxu0 0.0
    %249 = vmatprep.subr.mxu0 0.0
    %250 = vmatpush1.msra.mxu0 0.0
    %251 = vmatprep.subr.mxu0 0.0
    %252 = vmatpush1.msra.mxu0 0.0
    %253 = vmatprep.subr.mxu0 0.0
    %254 = vmatpush1.msra.mxu0 0.0
    %255 = vmatprep.subr.mxu0 0.0
    %256 = vmatpush1.msra.mxu0 0.0
    %257 = vmatprep.subr.mxu0 0.0
    %258 = vmatpush1.msra.mxu0 0.0
    %259 = vmatprep.subr.mxu0 0.0
    %260 = vmatpush1.msra.mxu0 0.0
    %261 = vmatprep.subr.mxu0 0.0
    %262 = vmatpush1.msra.mxu0 0.0
    %263 = vmatprep.subr.mxu0 0.0
    %264 = vmatpush1.msra.mxu0 0.0
    %265 = vmatprep.mubr.f32.mxu0 0.0
    %266 = vmatmul.mubr.f32.gmra.mrb[0].mxu0 %v177
    %v267 = vpop.f32.mrb[0].mxu0
    %v268 = vadd.f32 %v199, %v267
    %v269 = vpop.f32.mrb[0].mxu0
    %270 = vdwg.mxu0
    %v271 = vadd.f32 %v83, %v268
    %272 = vst [vmem:[#allocation11] sm:$0xff] %v271
    // Predicated region
    $region42: #{_mlp_forward_impl.1} parent=1 // pred_check
      _
    $region43: #{_mlp_forward_impl.1} parent=1 // pred_check_branch
      %274 = sbr.rel (0) target = $region45
    $region44: #{_mlp_forward_impl.1} parent=1 // pred_region
      %s276 = ssub.s32 128, 128
      %277 = vsyncadd [#allocation4], %s276
      %s279 = sshll.u32 [#allocation11], 4
      %s280 = int_to_ptr.vmem [resolvable:$true] %s279
      %282 = dma.vmem_to_hbm [thread:$0]  %s280, 128, %s5, [#allocation4]
    $region45: #{_mlp_forward_impl.1} parent=1 // pred_fallthru
      _
    // Predicated region
    $region46: #{_mlp_forward_impl.1} parent=1 // pred_check
      _
    $region47: #{_mlp_forward_impl.1} parent=1 // pred_check_branch
      %284 = sbr.rel (0) target = $region49
    $region48: #{_mlp_forward_impl.1} parent=1 // pred_region
      %285 = dma.done [#allocation4], 128
    $region49: #{_mlp_forward_impl.1} parent=1 // pred_fallthru
      _
    %286 = vsyncpa [#allocation3], 1
    %287 = vsyncpa [#allocation6], 1
    %288 = vsyncpa [#allocation9], 1
    %289 = vsyncpa [#allocation4], 1

</llo_original>
